<compile_context>
chip_gen: v7x
topology: tpu7x:2x2x1
jax: 0.10.0
libtpu: 0.0.40
codegen_flags: <defaults>
</compile_context>

<pallas_src>
import jax
import jax.numpy as jnp
from jax.experimental import pallas as pl
from jax.experimental.pallas import tpu as pltpu

OUT_CH = 128
HALF_CH = 100
IN_CH = 2 * HALF_CH  # 200

_LANE_TILE_CAP = 8192   # max lanes per grid step (per-step VMEM ~22 MiB at 8192)
_LANE_CHUNK = 2048      # in-kernel chunk for the (100, chunk) xs temp


def _round_up(x, m):
    return ((x + m - 1) // m) * m


def _choose_lane_tile(hw, n):
    """Pick a lane tile (multiple of 128, or the full extent) and grid length."""
    if hw <= 128:
        return hw, 1                       # full-extent block, no padding needed
    # Keep >= 2 total parallel steps when batch == 1 (v7x second TensorCore).
    min_splits = 1 if n >= 2 else 2
    splits = max(min_splits, pl.cdiv(hw, _LANE_TILE_CAP))
    tile = _round_up(pl.cdiv(hw, splits), 128)
    if tile >= hw:                         # full-extent block (legal for any hw)
        tile = hw
    return tile, pl.cdiv(hw, tile)


def _conv1x1_symm_kernel(w_ref, b_ref, x_ref, o_ref):
    # w_ref: (128, 100)            half weight (symmetry folded into input sum)
    # b_ref: (128, 1)              bias column (broadcast along lanes)
    # x_ref: (1, 2, 100, TILE)     the two input-channel halves for this tile
    # o_ref: (1, 128, TILE)        lane-dense output tile
    tile = o_ref.shape[-1]
    w = w_ref[...]
    b = b_ref[...]
    # Chunk the lane axis so the (100, chunk) f32 temp stays small at big tiles.
    start = 0
    while start < tile:
        c = min(_LANE_CHUNK, tile - start)
        sl = slice(start, start + c)
        xs = x_ref[0, 0, :, sl] + x_ref[0, 1, :, sl]          # VPU add, (100, c)
        acc = jnp.dot(w, xs, preferred_element_type=jnp.float32)  # MXU (128,100)@(100,c)
        o_ref[0, :, sl] = (acc + b).astype(o_ref.dtype)
        start += c


def conv2d_symm_gen_kernel(x, param, bias):
    """x: (N, 200, H, W) f32, param: (128, 100, 1, 1) f32, bias: (128,) f32."""
    N, Cin, H, W = x.shape
    assert Cin == IN_CH
    HW = H * W

    # Glue (all free / tiny): no duplicated (128,200) weight is materialized and
    # no HBM-transposing copies of x or the output exist.
    w_half = param[:, :, 0, 0]             # (128, 100)
    bias_col = bias.reshape(OUT_CH, 1)     # (128, 1)
    x4 = x.reshape(N, 2, HALF_CH, HW)      # pure dim-split reshape, no data movement

    tile_hw, grid_l = _choose_lane_tile(HW, N)

    out = pl.pallas_call(
        _conv1x1_symm_kernel,
        out_shape=jax.ShapeDtypeStruct((N, OUT_CH, HW), x.dtype),
        grid_spec=pltpu.PrefetchScalarGridSpec(
            num_scalar_prefetch=0,
            grid=(N, grid_l),
            in_specs=[
                pl.BlockSpec((OUT_CH, HALF_CH), lambda n, l: (0, 0)),        # half weight
                pl.BlockSpec((OUT_CH, 1), lambda n, l: (0, 0)),              # bias column
                pl.BlockSpec((1, 2, HALF_CH, tile_hw),
                             lambda n, l: (n, 0, 0, l)),                     # x halves
            ],
            out_specs=pl.BlockSpec((1, OUT_CH, tile_hw), lambda n, l: (n, 0, l)),
        ),
        compiler_params=pltpu.CompilerParams(
            dimension_semantics=("parallel", "parallel"),
            vmem_limit_bytes=48 << 20),
    )(w_half, bias_col, x4)

    # (N, 128, H*W) -> (N, 128, H, W): pure reshape, no copy.
    return out.reshape(N, OUT_CH, H, W)


if __name__ == "__main__":
    key = jax.random.PRNGKey(0)
    k_param, k_x = jax.random.split(key)

    # Deterministic parameter init matching module __init__ shapes:
    #   param = 1/sqrt(456) * randn(128, 100, 1, 1);  bias = zeros(128)
    param = (1.0 / jnp.sqrt(456.0)) * jax.random.normal(
        k_param, (OUT_CH, HALF_CH, 1, 1), dtype=jnp.float32)
    bias = jnp.zeros((OUT_CH,), dtype=jnp.float32)

    # Small input consistent with the module: N=2, C_in=200 (required), 8x8 spatial.
    N, H, W = 2, 8, 8
    x = jax.random.normal(k_x, (N, IN_CH, H, W), dtype=jnp.float32)

    fn = jax.jit(conv2d_symm_gen_kernel)
    out = fn(x, param, bias)
    out = jax.block_until_ready(out)

    # Reference check (plain JAX): symmetric-weight 1x1 conv.
    w_full = jnp.concatenate([param[:, :, 0, 0], param[:, :, 0, 0]], axis=1)
    ref = jnp.einsum("oc,nchw->nohw", w_full, x) + bias[None, :, None, None]
    assert out.shape == (N, OUT_CH, H, W)
    assert jnp.allclose(out, ref, atol=1e-4, rtol=1e-4)

    print("KERNEL_OK")
</pallas_src>

<mosaic_0001>
module attributes {stable_mosaic.version = 11 : i64} {
  func.func @_conv1x1_symm_kernel(%arg0: i32, %arg1: i32, %arg2: memref<128x100xf32, #tpu.memory_space<vmem>>, %arg3: memref<128x1xf32, #tpu.memory_space<vmem>>, %arg4: memref<1x2x100x64xf32, #tpu.memory_space<vmem>>, %arg5: memref<1x128x64xf32, #tpu.memory_space<vmem>>) attributes {dimension_semantics = [#tpu.dimension_semantics<parallel>, #tpu.dimension_semantics<parallel>], iteration_bounds = array<i64: 2, 1>, scalar_prefetch = 0 : i64, scratch_operands = 0 : i64, tpu.core_type = #tpu.core_type<tc>, window_params = [{pipeline_mode = #tpu.pipeline_mode<synchronous>, transform_indices = @transform_0, window_bounds = array<i64: 128, 100>}, {pipeline_mode = #tpu.pipeline_mode<synchronous>, transform_indices = @transform_1, window_bounds = array<i64: 128, 1>}, {transform_indices = @transform_2, window_bounds = array<i64: 1, 2, 100, 64>}, {transform_indices = @transform_3, window_bounds = array<i64: 1, 128, 64>}]} {
    %c0 = arith.constant 0 : index
    %c0_0 = arith.constant 0 : index
    %0 = vector.load %arg2[%c0, %c0_0] : memref<128x100xf32, #tpu.memory_space<vmem>>, vector<128x100xf32>
    %c0_1 = arith.constant 0 : index
    %c0_2 = arith.constant 0 : index
    %1 = vector.load %arg3[%c0_1, %c0_2] : memref<128x1xf32, #tpu.memory_space<vmem>>, vector<128x1xf32>
    %c0_3 = arith.constant 0 : index
    %c0_4 = arith.constant 0 : index
    %c0_5 = arith.constant 0 : index
    %c0_6 = arith.constant 0 : index
    %2 = vector.load %arg4[%c0_3, %c0_4, %c0_5, %c0_6] : memref<1x2x100x64xf32, #tpu.memory_space<vmem>>, vector<1x1x100x64xf32>
    %3 = vector.shape_cast %2 : vector<1x1x100x64xf32> to vector<100x64xf32>
    %c0_7 = arith.constant 0 : index
    %c1 = arith.constant 1 : index
    %c0_8 = arith.constant 0 : index
    %c0_9 = arith.constant 0 : index
    %4 = vector.load %arg4[%c0_7, %c1, %c0_8, %c0_9] : memref<1x2x100x64xf32, #tpu.memory_space<vmem>>, vector<1x1x100x64xf32>
    %5 = vector.shape_cast %4 : vector<1x1x100x64xf32> to vector<100x64xf32>
    %6 = arith.addf %3, %5 : vector<100x64xf32>
    %cst = arith.constant dense<0.000000e+00> : vector<128x64xf32>
    %7 = tpu.matmul %0, %6, %cst {dimension_numbers = #tpu.dot_dimension_numbers<[1], [0], [0], [1], [0, 0, 1, 1], [], []>} : vector<128x100xf32>, vector<100x64xf32>, vector<128x64xf32> -> vector<128x64xf32>
    %8 = vector.broadcast %1 : vector<128x1xf32> to vector<128x64xf32>
    %9 = arith.addf %7, %8 : vector<128x64xf32>
    %c0_10 = arith.constant 0 : index
    %c0_11 = arith.constant 0 : index
    %c0_12 = arith.constant 0 : index
    %10 = vector.load %arg5[%c0_10, %c0_11, %c0_12] : memref<1x128x64xf32, #tpu.memory_space<vmem>>, vector<1x128x64xf32>
    %11 = vector.shape_cast %10 : vector<1x128x64xf32> to vector<128x64xf32>
    %12 = vector.shape_cast %9 : vector<128x64xf32> to vector<1x128x64xf32>
    tpu.vector_store %arg5[%c0_10, %c0_11, %c0_12], %12 {strides = array<i32>} : memref<1x128x64xf32, #tpu.memory_space<vmem>>, vector<1x128x64xf32>,
    return
  }
  func.func @transform_0(%arg0: i32, %arg1: i32) -> (i32, i32) {
    %c0_i32 = arith.constant 0 : i32
    %c0_i32_0 = arith.constant 0 : i32
    %c0_i32_1 = arith.constant 0 : i32
    return %c0_i32, %c0_i32_0 : i32, i32
  }
  func.func @transform_1(%arg0: i32, %arg1: i32) -> (i32, i32) {
    %c0_i32 = arith.constant 0 : i32
    %c0_i32_0 = arith.constant 0 : i32
    %c0_i32_1 = arith.constant 0 : i32
    return %c0_i32, %c0_i32_0 : i32, i32
  }
  func.func @transform_2(%arg0: i32, %arg1: i32) -> (i32, i32, i32, i32) {
    %c0_i32 = arith.constant 0 : i32
    %c0_i32_0 = arith.constant 0 : i32
    %c0_i32_1 = arith.constant 0 : i32
    return %arg0, %c0_i32, %c0_i32_0, %arg1 : i32, i32, i32, i32
  }
  func.func @transform_3(%arg0: i32, %arg1: i32) -> (i32, i32, i32) {
    %c0_i32 = arith.constant 0 : i32
    %c0_i32_0 = arith.constant 0 : i32
    return %arg0, %c0_i32, %arg1 : i32, i32, i32
  }
}

</mosaic_0001>

<llo_original>
// kernel: conv2d_symm_gen_kernel.1
$region0: #{conv2d_symm_gen_kernel.1}
  #allocation0 [shape = 'u32[]', space=smem, size = 0x4, offset = 0x4, fixed_abs, tag = 'smem constant byte address 0x4 - core index']
  #allocation1 [shape = 'u32[144,128]{1,0:T(1,128)}', space=vmem, size = 0x12000, scoped, tag = 'internal scratch']
  %s0 = inlined_call_operand.vmem [shape: f32[128,100], index: 0, kind: input, shape index: {}]
  %s1 = inlined_call_operand.vmem [shape: f32[128,1], index: 1, kind: input, shape index: {}]
  %s2 = inlined_call_operand.vmem [shape: f32[2,2,100,64], index: 2, kind: input, shape index: {}]
  %s3 = inlined_call_operand.vmem [shape: f32[2,128,64], index: 3, kind: output, shape index: {}]
  %s4 = sld [smem:[#allocation0]]
  $region45: #{conv2d_symm_gen_kernel.1} parent=0
    _
  %s6 = ssub.s32 1, %s4
  %s7 = scalar_select 0, %s6, %s4
  loop: start=0, step=1, limit=4
  $region2: #{conv2d_symm_gen_kernel.1} parent=0 // loop_pre_header
    _
  $region3: #{conv2d_symm_gen_kernel.1} parent=0 // loop_header
    %s9 = sphi 0, %s13
    %p10 = scmp.ge.s32.totalorder %s9, 4
    %s16 = sphi 0, %s28
    %s17 = sphi 0, %s24
    %s18 = sphi 0, %s16
    %s19 = sphi 0, %s17
    %s20 = sphi 0, %s18
    %s21 = sphi 0, %s19
    %s29 = sphi 0, %s29
    %s31 = sphi 0, %s29
    %s32 = sphi 0, %s31
    %s46 = sphi 0, %s32
    %s50 = sphi 0, %s50
    %s52 = sphi 0, %s50
    %s53 = sphi 0, %s52
    %s67 = sphi 0, %s53
    %s75 = sphi 0, %s77
    %s78 = sphi 0, %s75
    %s79 = sphi 0, %s78
    %s95 = sphi 0, %s79
    %s103 = sphi 0, %s105
    %s106 = sphi 0, %s103
    %s107 = sphi 0, %s106
    %s123 = sphi 0, %s107
  $region4: #{conv2d_symm_gen_kernel.1} parent=0 // loop_header_branch
    %12 = sbr.rel (%p10) target = $region8
  $region5: #{conv2d_symm_gen_kernel.1} parent=0 // loop_body
    %s14 = ssub.s32 %s9, 1
    %s15 = ssub.s32 %s9, 2
    %s22 = sadd.s32 1, %s17
    %p23 = scmp.ge.s32.totalorder %s22, 1
    %s24 = scalar_select %p23, 0, %s22
    %s25 = sadd.s32 1, %s16
    %s26 = scalar_select %p23, %s25, %s16
    %p27 = scmp.ge.s32.totalorder %s26, 2
    %s28 = scalar_select %p27, 0, %s26
    %s30 = sadd.s32 %s29, 1
    %p33 = scmp.eq.s32.totalorder %s9, 1
    %p34 = scmp.ne.s32.totalorder %s29, %s31
    %p35 = scmp.eq.s32.totalorder %s9, 0
    %p36 = por %p34, %p35
    %p37 = scmp.ne.s32.totalorder %s29, %s31
    %p38 = scmp.eq.s32.totalorder %s14, 1
    %p39 = por %p37, %p38
    %p40 = scmp.ne.s32.totalorder %s31, %s32
    %p41 = scmp.eq.s32.totalorder %s14, 0
    %p42 = por %p40, %p41
    %p43 = scmp.ne.s32.totalorder %s31, %s32
    %p44 = scmp.eq.s32.totalorder %s15, 1
    %p45 = por %p43, %p44
    %p47 = scmp.ne.s32.totalorder %s32, %s46
    %p48 = scmp.eq.s32.totalorder %s15, 0
    %p49 = por %p47, %p48
    %s51 = sadd.s32 %s50, 1
    %p54 = scmp.eq.s32.totalorder %s9, 1
    %p55 = scmp.ne.s32.totalorder %s50, %s52
    %p56 = scmp.eq.s32.totalorder %s9, 0
    %p57 = por %p55, %p56
    %p58 = scmp.ne.s32.totalorder %s50, %s52
    %p59 = scmp.eq.s32.totalorder %s14, 1
    %p60 = por %p58, %p59
    %p61 = scmp.ne.s32.totalorder %s52, %s53
    %p62 = scmp.eq.s32.totalorder %s14, 0
    %p63 = por %p61, %p62
    %p64 = scmp.ne.s32.totalorder %s52, %s53
    %p65 = scmp.eq.s32.totalorder %s15, 1
    %p66 = por %p64, %p65
    %p68 = scmp.ne.s32.totalorder %s53, %s67
    %p69 = scmp.eq.s32.totalorder %s15, 0
    %p70 = por %p68, %p69
    %s71 = ssub.s32 %s16, %s28
    %s72 = ssub.s32 %s17, %s24
    %s73 = sor.u32 %s71, %s72
    %p74 = scmp.eq.s32.totalorder %s73, 0
    %s76 = sadd.s32 %s75, 1
    %s77 = scalar_select %p74, %s75, %s76
    %p80 = pneg %p74
    %p81 = scmp.eq.s32.totalorder %s9, 1
    %p82 = por %p80, %p81
    %p83 = scmp.ne.s32.totalorder %s75, %s78
    %p84 = scmp.eq.s32.totalorder %s9, 0
    %p85 = por %p83, %p84
    %p86 = scmp.ne.s32.totalorder %s75, %s78
    %p87 = scmp.eq.s32.totalorder %s14, 1
    %p88 = por %p86, %p87
    %p89 = scmp.ne.s32.totalorder %s78, %s79
    %p90 = scmp.eq.s32.totalorder %s14, 0
    %p91 = por %p89, %p90
    %p92 = scmp.ne.s32.totalorder %s78, %s79
    %p93 = scmp.eq.s32.totalorder %s15, 1
    %p94 = por %p92, %p93
    %p96 = scmp.ne.s32.totalorder %s79, %s95
    %p97 = scmp.eq.s32.totalorder %s15, 0
    %p98 = por %p96, %p97
    %s99 = ssub.s32 %s16, %s28
    %s100 = ssub.s32 %s17, %s24
    %s101 = sor.u32 %s99, %s100
    %p102 = scmp.eq.s32.totalorder %s101, 0
    %s104 = sadd.s32 %s103, 1
    %s105 = scalar_select %p102, %s103, %s104
    %p108 = pneg %p102
    %p109 = scmp.eq.s32.totalorder %s9, 1
    %p110 = por %p108, %p109
    %p111 = scmp.ne.s32.totalorder %s103, %s106
    %p112 = scmp.eq.s32.totalorder %s9, 0
    %p113 = por %p111, %p112
    %p114 = scmp.ne.s32.totalorder %s103, %s106
    %p115 = scmp.eq.s32.totalorder %s14, 1
    %p116 = por %p114, %p115
    %p117 = scmp.ne.s32.totalorder %s106, %s107
    %p118 = scmp.eq.s32.totalorder %s14, 0
    %p119 = por %p117, %p118
    %p120 = scmp.ne.s32.totalorder %s106, %s107
    %p121 = scmp.eq.s32.totalorder %s15, 1
    %p122 = por %p120, %p121
    %p124 = scmp.ne.s32.totalorder %s107, %s123
    %p125 = scmp.eq.s32.totalorder %s15, 0
    %p126 = por %p124, %p125
    %p127 = scmp.le.s32.totalorder 1, %s9
    %p128 = scmp.lt.s32.totalorder %s9, 3
    %p129 = pnand %p127, %p128
    %p130 = pneg %p129
    // Predicated region
    $region9: #{conv2d_symm_gen_kernel.1} parent=5 // pred_check
      _
    $region10: #{conv2d_symm_gen_kernel.1} parent=5 // pred_check_branch
      %132 = sbr.rel (%p129) target = $region12
    $region11: #{conv2d_symm_gen_kernel.1} parent=5 // pred_region
      %s133 = ssub.s32 %s9, 1
      // Predicated region
      $region13: #{conv2d_symm_gen_kernel.1} parent=11 // pred_check
        %p134 = pneg %p42
      $region14: #{conv2d_symm_gen_kernel.1} parent=11 // pred_check_branch
        %136 = sbr.rel (%p134) target = $region16
      $region15: #{conv2d_symm_gen_kernel.1} parent=11 // pred_region
        _
      $region16: #{conv2d_symm_gen_kernel.1} parent=11 // pred_fallthru
        _
      // Predicated region
      $region17: #{conv2d_symm_gen_kernel.1} parent=11 // pred_check
        %p137 = pneg %p63
      $region18: #{conv2d_symm_gen_kernel.1} parent=11 // pred_check_branch
        %139 = sbr.rel (%p137) target = $region20
      $region19: #{conv2d_symm_gen_kernel.1} parent=11 // pred_region
        _
      $region20: #{conv2d_symm_gen_kernel.1} parent=11 // pred_fallthru
        _
    $region12: #{conv2d_symm_gen_kernel.1} parent=5 // pred_fallthru
      _
    %p140 = scmp.lt.s32.totalorder %s9, 2
    // Predicated region
    $region21: #{conv2d_symm_gen_kernel.1} parent=5 // pred_check
      %p141 = pneg %p140
    $region22: #{conv2d_symm_gen_kernel.1} parent=5 // pred_check_branch
      %143 = sbr.rel (%p141) target = $region24
    $region23: #{conv2d_symm_gen_kernel.1} parent=5 // pred_region
      // Predicated region
      $region25: #{conv2d_symm_gen_kernel.1} parent=23 // pred_check
        %p144 = pneg %p85
      $region26: #{conv2d_symm_gen_kernel.1} parent=23 // pred_check_branch
        %146 = sbr.rel (%p144) target = $region28
      $region27: #{conv2d_symm_gen_kernel.1} parent=23 // pred_region
        %p147 = scmp.lt.s32.totalorder %s16, 1
        %s148 = scalar_select %p147, %s16, 1
        %p149 = scmp.lt.s32.totalorder %s17, 0
        %s150 = scalar_select %p149, %s17, 0
        %s151 = smul.addr %s148, 26
        %s152 = sadd.s32 %s150, %s151
        %s153 = smul.addr %s152, 8
        %s154 = scalar_lea.vmem %s2, %s153
      $region28: #{conv2d_symm_gen_kernel.1} parent=23 // pred_fallthru
        _
    $region24: #{conv2d_symm_gen_kernel.1} parent=5 // pred_fallthru
      _
    %p155 = scmp.le.s32.totalorder 1, %s9
    %p156 = scmp.lt.s32.totalorder %s9, 3
    %p157 = pnand %p155, %p156
    %p158 = pneg %p157
    // Predicated region
    $region29: #{conv2d_symm_gen_kernel.1} parent=5 // pred_check
      _
    $region30: #{conv2d_symm_gen_kernel.1} parent=5 // pred_check_branch
      %160 = sbr.rel (%p157) target = $region32
    $region31: #{conv2d_symm_gen_kernel.1} parent=5 // pred_region
      %s161 = ssub.s32 %s9, 1
      %p162 = pneg %p42
      %p163 = pneg %p39
      %p164 = pneg %p63
      %p165 = pneg %p60
      %p166 = scmp.lt.s32.totalorder %s18, 1
      %s167 = scalar_select %p166, %s18, 1
      %p168 = scmp.lt.s32.totalorder %s19, 0
      %s169 = scalar_select %p168, %s19, 0
      %s170 = smul.addr %s167, 26
      %s171 = sadd.s32 %s169, %s170
      %s172 = smul.addr %s171, 8
      %s173 = scalar_lea.vmem %s2, %s172
      %p174 = pneg %p91
      %p175 = pneg %p88
      %p176 = pneg %p119
      %p177 = pneg %p116
      %p178 = scmp.lt.s32.totalorder %s18, 1
      %s179 = scalar_select %p178, %s18, 1
      %p180 = scmp.lt.s32.totalorder %s19, 0
      %s181 = scalar_select %p180, %s19, 0
      %s182 = smul.addr %s179, 16
      %s183 = sadd.s32 %s181, %s182
      %s184 = smul.addr %s183, 8
      %s185 = scalar_lea.vmem %s3, %s184
      %p186 = scmp.lt.s32.totalorder %s18, 1
      %s187 = scalar_select %p186, %s18, 1
      %p188 = scmp.lt.s32.totalorder %s19, 0
      %s189 = scalar_select %p188, %s19, 0
      %s190 = smul.addr %s187, 26
      %s191 = sadd.s32 %s189, %s190
      %s192 = smul.addr %s191, 8
      %s193 = scalar_lea.vmem %s2, %s192
      %p194 = scmp.lt.s32.totalorder %s18, 1
      %s195 = scalar_select %p194, %s18, 1
      %p196 = scmp.lt.s32.totalorder %s19, 0
      %s197 = scalar_select %p196, %s19, 0
      %s198 = smul.addr %s195, 16
      %s199 = sadd.s32 %s197, %s198
      %s200 = smul.addr %s199, 8
      %s201 = scalar_lea.vmem %s3, %s200
      %v202 = vld [vmem:[%s0] sm:$0xff]
      %v203 = vld [vmem:[%s0 + $0x8] sm:$0xff]
      %v204 = vld [vmem:[%s0 + $0x10] sm:$0xff]
      %v205 = vld [vmem:[%s0 + $0x18] sm:$0xff]
      %v206 = vld [vmem:[%s0 + $0x20] sm:$0xff]
      %v207 = vld [vmem:[%s0 + $0x28] sm:$0xff]
      %v208 = vld [vmem:[%s0 + $0x30] sm:$0xff]
      %v209 = vld [vmem:[%s0 + $0x38] sm:$0xff]
      %v210 = vld [vmem:[%s0 + $0x40] sm:$0xff]
      %v211 = vld [vmem:[%s0 + $0x48] sm:$0xff]
      %v212 = vld [vmem:[%s0 + $0x50] sm:$0xff]
      %v213 = vld [vmem:[%s0 + $0x58] sm:$0xff]
      %v214 = vld [vmem:[%s0 + $0x60] sm:$0xff]
      %v215 = vld [vmem:[%s0 + $0x68] sm:$0xff]
      %v216 = vld [vmem:[%s0 + $0x70] sm:$0xff]
      %v217 = vld [vmem:[%s0 + $0x78] sm:$0xff]
      %v218 = vld [vmem:[%s1] sm:$0xff]
      %v219 = vld [vmem:[%s1 + $0x8] sm:$0xff]
      %v220 = vld [vmem:[%s1 + $0x10] sm:$0xff]
      %v221 = vld [vmem:[%s1 + $0x18] sm:$0xff]
      %v222 = vld [vmem:[%s1 + $0x20] sm:$0xff]
      %v223 = vld [vmem:[%s1 + $0x28] sm:$0xff]
      %v224 = vld [vmem:[%s1 + $0x30] sm:$0xff]
      %v225 = vld [vmem:[%s1 + $0x38] sm:$0xff]
      %v226 = vld [vmem:[%s1 + $0x40] sm:$0xff]
      %v227 = vld [vmem:[%s1 + $0x48] sm:$0xff]
      %v228 = vld [vmem:[%s1 + $0x50] sm:$0xff]
      %v229 = vld [vmem:[%s1 + $0x58] sm:$0xff]
      %v230 = vld [vmem:[%s1 + $0x60] sm:$0xff]
      %v231 = vld [vmem:[%s1 + $0x68] sm:$0xff]
      %v232 = vld [vmem:[%s1 + $0x70] sm:$0xff]
      %v233 = vld [vmem:[%s1 + $0x78] sm:$0xff]
      %v234 = vld [vmem:[%s193] sm:$0xff]
      %v235 = vld [vmem:[%s193 + $0x8] sm:$0xff]
      %v236 = vld [vmem:[%s193 + $0x10] sm:$0xff]
      %v237 = vld [vmem:[%s193 + $0x18] sm:$0xff]
      %v238 = vld [vmem:[%s193 + $0x20] sm:$0xff]
      %v239 = vld [vmem:[%s193 + $0x28] sm:$0xff]
      %v240 = vld [vmem:[%s193 + $0x30] sm:$0xff]
      %v241 = vld [vmem:[%s193 + $0x38] sm:$0xff]
      %v242 = vld [vmem:[%s193 + $0x40] sm:$0xff]
      %v243 = vld [vmem:[%s193 + $0x48] sm:$0xff]
      %v244 = vld [vmem:[%s193 + $0x50] sm:$0xff]
      %v245 = vld [vmem:[%s193 + $0x58] sm:$0xff]
      %v246 = vld [vmem:[%s193 + $0x60] sm:$0xf]
      %s247 = scalar_lea.vmem %s193, 104
      %v248 = vld [vmem:[%s247] sm:$0xff]
      %v249 = vld [vmem:[%s247 + $0x8] sm:$0xff]
      %v250 = vld [vmem:[%s247 + $0x10] sm:$0xff]
      %v251 = vld [vmem:[%s247 + $0x18] sm:$0xff]
      %v252 = vld [vmem:[%s247 + $0x20] sm:$0xff]
      %v253 = vld [vmem:[%s247 + $0x28] sm:$0xff]
      %v254 = vld [vmem:[%s247 + $0x30] sm:$0xff]
      %v255 = vld [vmem:[%s247 + $0x38] sm:$0xff]
      %v256 = vld [vmem:[%s247 + $0x40] sm:$0xff]
      %v257 = vld [vmem:[%s247 + $0x48] sm:$0xff]
      %v258 = vld [vmem:[%s247 + $0x50] sm:$0xff]
      %v259 = vld [vmem:[%s247 + $0x58] sm:$0xff]
      %v260 = vld [vmem:[%s247 + $0x60] sm:$0xf]
      %v261 = vadd.f32 %v234, %v248
      %v262 = vadd.f32 %v235, %v249
      %v263 = vadd.f32 %v236, %v250
      %v264 = vadd.f32 %v237, %v251
      %v265 = vadd.f32 %v238, %v252
      %v266 = vadd.f32 %v239, %v253
      %v267 = vadd.f32 %v240, %v254
      %v268 = vadd.f32 %v241, %v255
      %v269 = vadd.f32 %v242, %v256
      %v270 = vadd.f32 %v243, %v257
      %v271 = vadd.f32 %v244, %v258
      %v272 = vadd.f32 %v245, %v259
      %v273 = vadd.f32 %v246, %v260
      %275 = vset.pattern.permute.xlu0 0
      %276 = vperm.xlu0 %275, %v218
      %v277 = vpop.permute.xlu0 %276
      %280 = vset.pattern.permute.xlu0 0
      %281 = vperm.xlu0 %280, %v219
      %v282 = vpop.permute.xlu0 %281
      %285 = vset.pattern.permute.xlu0 0
      %286 = vperm.xlu0 %285, %v220
      %v287 = vpop.permute.xlu0 %286
      %290 = vset.pattern.permute.xlu0 0
      %291 = vperm.xlu0 %290, %v221
      %v292 = vpop.permute.xlu0 %291
      %295 = vset.pattern.permute.xlu0 0
      %296 = vperm.xlu0 %295, %v222
      %v297 = vpop.permute.xlu0 %296
      %300 = vset.pattern.permute.xlu0 0
      %301 = vperm.xlu0 %300, %v223
      %v302 = vpop.permute.xlu0 %301
      %305 = vset.pattern.permute.xlu0 0
      %306 = vperm.xlu0 %305, %v224
      %v307 = vpop.permute.xlu0 %306
      %310 = vset.pattern.permute.xlu0 0
      %311 = vperm.xlu0 %310, %v225
      %v312 = vpop.permute.xlu0 %311
      %315 = vset.pattern.permute.xlu0 0
      %316 = vperm.xlu0 %315, %v226
      %v317 = vpop.permute.xlu0 %316
      %320 = vset.pattern.permute.xlu0 0
      %321 = vperm.xlu0 %320, %v227
      %v322 = vpop.permute.xlu0 %321
      %325 = vset.pattern.permute.xlu0 0
      %326 = vperm.xlu0 %325, %v228
      %v327 = vpop.permute.xlu0 %326
      %330 = vset.pattern.permute.xlu0 0
      %331 = vperm.xlu0 %330, %v229
      %v332 = vpop.permute.xlu0 %331
      %335 = vset.pattern.permute.xlu0 0
      %336 = vperm.xlu0 %335, %v230
      %v337 = vpop.permute.xlu0 %336
      %340 = vset.pattern.permute.xlu0 0
      %341 = vperm.xlu0 %340, %v231
      %v342 = vpop.permute.xlu0 %341
      %345 = vset.pattern.permute.xlu0 0
      %346 = vperm.xlu0 %345, %v232
      %v347 = vpop.permute.xlu0 %346
      %350 = vset.pattern.permute.xlu0 0
      %351 = vperm.xlu0 %350, %v233
      %v352 = vpop.permute.xlu0 %351
      %vm354 = vcmask 818176
      %v356 = vsel %vm354, %v202, 0
      %v359 = vsel %vm354, %v203, 0
      %v362 = vsel %vm354, %v204, 0
      %v365 = vsel %vm354, %v205, 0
      %v368 = vsel %vm354, %v206, 0
      %v371 = vsel %vm354, %v207, 0
      %v374 = vsel %vm354, %v208, 0
      %v377 = vsel %vm354, %v209, 0
      %v380 = vsel %vm354, %v210, 0
      %v383 = vsel %vm354, %v211, 0
      %v386 = vsel %vm354, %v212, 0
      %v389 = vsel %vm354, %v213, 0
      %v392 = vsel %vm354, %v214, 0
      %v395 = vsel %vm354, %v215, 0
      %v398 = vsel %vm354, %v216, 0
      %v401 = vsel %vm354, %v217, 0
      %vm403 = vcmask 1043456
      %v405 = vsel %vm403, %v273, 0
      %407 = vmatprep.subr.mxu0 0.0
      %408 = vmatpush1.msra.mxu0 %v261
      %409 = vmatprep.subr.mxu0 0.0
      %410 = vmatpush1.msra.mxu0 %v262
      %411 = vmatprep.subr.mxu0 0.0
      %412 = vmatpush1.msra.mxu0 %v263
      %413 = vmatprep.subr.mxu0 0.0
      %414 = vmatpush1.msra.mxu0 %v264
      %415 = vmatprep.subr.mxu0 0.0
      %416 = vmatpush1.msra.mxu0 %v265
      %417 = vmatprep.subr.mxu0 0.0
      %418 = vmatpush1.msra.mxu0 %v266
      %419 = vmatprep.subr.mxu0 0.0
      %420 = vmatpush1.msra.mxu0 %v267
      %421 = vmatprep.subr.mxu0 0.0
      %422 = vmatpush1.msra.mxu0 %v268
      %423 = vmatprep.subr.mxu0 0.0
      %424 = vmatpush1.msra.mxu0 %v269
      %425 = vmatprep.subr.mxu0 0.0
      %426 = vmatpush1.msra.mxu0 %v270
      %427 = vmatprep.subr.mxu0 0.0
      %428 = vmatpush1.msra.mxu0 %v271
      %429 = vmatprep.subr.mxu0 0.0
      %430 = vmatpush1.msra.mxu0 %v272
      %431 = vmatprep.subr.mxu0 0.0
      %432 = vmatpush1.msra.mxu0 %v405
      %433 = vmatprep.subr.mxu0 0.0
      %434 = vmatpush1.msra.mxu0 0.0
      %435 = vmatprep.subr.mxu0 0.0
      %436 = vmatpush1.msra.mxu0 0.0
      %437 = vmatprep.subr.mxu0 0.0
      %438 = vmatpush1.msra.mxu0 0.0
      %439 = vmatprep.subr.mxu0 0.0
      %440 = vmatpush1.msra.mxu0 0.0
      %441 = vmatprep.subr.mxu0 0.0
      %442 = vmatpush1.msra.mxu0 0.0
      %443 = vmatprep.subr.mxu0 0.0
      %444 = vmatpush1.msra.mxu0 0.0
      %445 = vmatprep.subr.mxu0 0.0
      %446 = vmatpush1.msra.mxu0 0.0
      %447 = vmatprep.subr.mxu0 0.0
      %448 = vmatpush1.msra.mxu0 0.0
      %449 = vmatprep.subr.mxu0 0.0
      %450 = vmatpush1.msra.mxu0 0.0
      %451 = vmatprep.subr.mxu0 0.0
      %452 = vmatpush1.msra.mxu0 0.0
      %453 = vmatprep.subr.mxu0 0.0
      %454 = vmatpush1.msra.mxu0 0.0
      %455 = vmatprep.subr.mxu0 0.0
      %456 = vmatpush1.msra.mxu0 0.0
      %457 = vmatprep.subr.mxu0 0.0
      %458 = vmatpush1.msra.mxu0 0.0
      %459 = vmatprep.subr.mxu0 0.0
      %460 = vmatpush1.msra.mxu0 0.0
      %461 = vmatprep.subr.mxu0 0.0
      %462 = vmatpush1.msra.mxu0 0.0
      %463 = vmatprep.subr.mxu0 0.0
      %464 = vmatpush1.msra.mxu0 0.0
      %465 = vmatprep.subr.mxu0 0.0
      %466 = vmatpush1.msra.mxu0 0.0
      %467 = vmatprep.subr.mxu0 0.0
      %468 = vmatpush1.msra.mxu0 0.0
      %469 = vmatprep.subr.mxu0 0.0
      %470 = vmatpush1.msra.mxu0 0.0
      %471 = vmatprep.mubr.f32.mxu0 0.0
      %472 = vmatmul.mubr.f32.gmra.mrb[0].mxu0 %v356
      %v473 = vpop.f32.mrb[0].mxu0
      %v474 = vadd.f32 %v277, %v473
      %v475 = vpop.f32.mrb[0].mxu0
      %476 = vmatprep.mubr.f32.mxu0 0.0
      %477 = vmatmul.mubr.f32.gmra.mrb[0].mxu0 %v359
      %v478 = vpop.f32.mrb[0].mxu0
      %v479 = vadd.f32 %v282, %v478
      %v480 = vpop.f32.mrb[0].mxu0
      %481 = vmatprep.mubr.f32.mxu0 0.0
      %482 = vmatmul.mubr.f32.gmra.mrb[0].mxu0 %v362
      %v483 = vpop.f32.mrb[0].mxu0
      %v484 = vadd.f32 %v287, %v483
      %v485 = vpop.f32.mrb[0].mxu0
      %486 = vmatprep.mubr.f32.mxu0 0.0
      %487 = vmatmul.mubr.f32.gmra.mrb[0].mxu0 %v365
      %v488 = vpop.f32.mrb[0].mxu0
      %v489 = vadd.f32 %v292, %v488
      %v490 = vpop.f32.mrb[0].mxu0
      %491 = vmatprep.mubr.f32.mxu0 0.0
      %492 = vmatmul.mubr.f32.gmra.mrb[0].mxu0 %v368
      %v493 = vpop.f32.mrb[0].mxu0
      %v494 = vadd.f32 %v297, %v493
      %v495 = vpop.f32.mrb[0].mxu0
      %496 = vmatprep.mubr.f32.mxu0 0.0
      %497 = vmatmul.mubr.f32.gmra.mrb[0].mxu0 %v371
      %v498 = vpop.f32.mrb[0].mxu0
      %v499 = vadd.f32 %v302, %v498
      %v500 = vpop.f32.mrb[0].mxu0
      %501 = vmatprep.mubr.f32.mxu0 0.0
      %502 = vmatmul.mubr.f32.gmra.mrb[0].mxu0 %v374
      %v503 = vpop.f32.mrb[0].mxu0
      %v504 = vadd.f32 %v307, %v503
      %v505 = vpop.f32.mrb[0].mxu0
      %506 = vmatprep.mubr.f32.mxu0 0.0
      %507 = vmatmul.mubr.f32.gmra.mrb[0].mxu0 %v377
      %v508 = vpop.f32.mrb[0].mxu0
      %v509 = vadd.f32 %v312, %v508
      %v510 = vpop.f32.mrb[0].mxu0
      %511 = vmatprep.mubr.f32.mxu0 0.0
      %512 = vmatmul.mubr.f32.gmra.mrb[0].mxu0 %v380
      %v513 = vpop.f32.mrb[0].mxu0
      %v514 = vadd.f32 %v317, %v513
      %v515 = vpop.f32.mrb[0].mxu0
      %516 = vmatprep.mubr.f32.mxu0 0.0
      %517 = vmatmul.mubr.f32.gmra.mrb[0].mxu0 %v383
      %v518 = vpop.f32.mrb[0].mxu0
      %v519 = vadd.f32 %v322, %v518
      %v520 = vpop.f32.mrb[0].mxu0
      %521 = vmatprep.mubr.f32.mxu0 0.0
      %522 = vmatmul.mubr.f32.gmra.mrb[0].mxu0 %v386
      %v523 = vpop.f32.mrb[0].mxu0
      %v524 = vadd.f32 %v327, %v523
      %v525 = vpop.f32.mrb[0].mxu0
      %526 = vmatprep.mubr.f32.mxu0 0.0
      %527 = vmatmul.mubr.f32.gmra.mrb[0].mxu0 %v389
      %v528 = vpop.f32.mrb[0].mxu0
      %v529 = vadd.f32 %v332, %v528
      %v530 = vpop.f32.mrb[0].mxu0
      %531 = vmatprep.mubr.f32.mxu0 0.0
      %532 = vmatmul.mubr.f32.gmra.mrb[0].mxu0 %v392
      %v533 = vpop.f32.mrb[0].mxu0
      %v534 = vadd.f32 %v337, %v533
      %v535 = vpop.f32.mrb[0].mxu0
      %536 = vmatprep.mubr.f32.mxu0 0.0
      %537 = vmatmul.mubr.f32.gmra.mrb[0].mxu0 %v395
      %v538 = vpop.f32.mrb[0].mxu0
      %v539 = vadd.f32 %v342, %v538
      %v540 = vpop.f32.mrb[0].mxu0
      %541 = vmatprep.mubr.f32.mxu0 0.0
      %542 = vmatmul.mubr.f32.gmra.mrb[0].mxu0 %v398
      %v543 = vpop.f32.mrb[0].mxu0
      %v544 = vadd.f32 %v347, %v543
      %v545 = vpop.f32.mrb[0].mxu0
      %546 = vmatprep.mubr.f32.mxu0 0.0
      %547 = vmatmul.mubr.f32.gmra.mrb[0].mxu0 %v401
      %v548 = vpop.f32.mrb[0].mxu0
      %v549 = vadd.f32 %v352, %v548
      %v550 = vpop.f32.mrb[0].mxu0
      %551 = vdwg.mxu0
      %vm552 = vcmask 523264
      %553 = vst.msk [vmem:[%s201] sm:$0xff] %vm552, %v474
      %554 = vst.msk [vmem:[%s201 + $0x8] sm:$0xff] %vm552, %v479
      %555 = vst.msk [vmem:[%s201 + $0x10] sm:$0xff] %vm552, %v484
      %556 = vst.msk [vmem:[%s201 + $0x18] sm:$0xff] %vm552, %v489
      %557 = vst.msk [vmem:[%s201 + $0x20] sm:$0xff] %vm552, %v494
      %558 = vst.msk [vmem:[%s201 + $0x28] sm:$0xff] %vm552, %v499
      %559 = vst.msk [vmem:[%s201 + $0x30] sm:$0xff] %vm552, %v504
      %560 = vst.msk [vmem:[%s201 + $0x38] sm:$0xff] %vm552, %v509
      %561 = vst.msk [vmem:[%s201 + $0x40] sm:$0xff] %vm552, %v514
      %562 = vst.msk [vmem:[%s201 + $0x48] sm:$0xff] %vm552, %v519
      %563 = vst.msk [vmem:[%s201 + $0x50] sm:$0xff] %vm552, %v524
      %564 = vst.msk [vmem:[%s201 + $0x58] sm:$0xff] %vm552, %v529
      %565 = vst.msk [vmem:[%s201 + $0x60] sm:$0xff] %vm552, %v534
      %566 = vst.msk [vmem:[%s201 + $0x68] sm:$0xff] %vm552, %v539
      %567 = vst.msk [vmem:[%s201 + $0x70] sm:$0xff] %vm552, %v544
      %568 = vst.msk [vmem:[%s201 + $0x78] sm:$0xff] %vm552, %v549
      %p569 = scmp.lt.s32.totalorder %s18, 1
      %s570 = scalar_select %p569, %s18, 1
      %p571 = scmp.lt.s32.totalorder %s19, 0
      %s572 = scalar_select %p571, %s19, 0
      %s573 = smul.addr %s570, 16
      %s574 = sadd.s32 %s572, %s573
      %s575 = smul.addr %s574, 8
      %s576 = scalar_lea.vmem %s3, %s575
      // Predicated region
      $region33: #{conv2d_symm_gen_kernel.1} parent=31 // pred_check
        %p577 = pneg %p116
      $region34: #{conv2d_symm_gen_kernel.1} parent=31 // pred_check_branch
        %579 = sbr.rel (%p577) target = $region36
      $region35: #{conv2d_symm_gen_kernel.1} parent=31 // pred_region
        _
      $region36: #{conv2d_symm_gen_kernel.1} parent=31 // pred_fallthru
        _
    $region32: #{conv2d_symm_gen_kernel.1} parent=5 // pred_fallthru
      _
    %p580 = scmp.le.s32.totalorder 2, %s9
    // Predicated region
    $region37: #{conv2d_symm_gen_kernel.1} parent=5 // pred_check
      %p581 = pneg %p580
    $region38: #{conv2d_symm_gen_kernel.1} parent=5 // pred_check_branch
      %583 = sbr.rel (%p581) target = $region40
    $region39: #{conv2d_symm_gen_kernel.1} parent=5 // pred_region
      %s584 = ssub.s32 %s9, 2
      // Predicated region
      $region41: #{conv2d_symm_gen_kernel.1} parent=39 // pred_check
        %p585 = pneg %p122
      $region42: #{conv2d_symm_gen_kernel.1} parent=39 // pred_check_branch
        %587 = sbr.rel (%p585) target = $region44
      $region43: #{conv2d_symm_gen_kernel.1} parent=39 // pred_region
        %p588 = scmp.lt.s32.totalorder %s20, 1
        %s589 = scalar_select %p588, %s20, 1
        %p590 = scmp.lt.s32.totalorder %s21, 0
        %s591 = scalar_select %p590, %s21, 0
        %s592 = smul.addr %s589, 16
        %s593 = sadd.s32 %s591, %s592
        %s594 = smul.addr %s593, 8
        %s595 = scalar_lea.vmem %s3, %s594
      $region44: #{conv2d_symm_gen_kernel.1} parent=39 // pred_fallthru
        _
    $region40: #{conv2d_symm_gen_kernel.1} parent=5 // pred_fallthru
      _
  $region6: #{conv2d_symm_gen_kernel.1} parent=0 // loop_footer
    %s13 = sadd.s32 1, %s9
  $region7: #{conv2d_symm_gen_kernel.1} parent=0 // loop_footer_branch
    %8 = sbr.rel target = $region3
  $region8: #{conv2d_symm_gen_kernel.1} parent=0 // loop_exit
    _

</llo_original>
